<compile_context>
chip_gen: v7x
topology: tpu7x:2x2x1
jax: 0.10.0
libtpu: 0.0.40
codegen_flags: <defaults>
</compile_context>

<pallas_src>
import jax
import jax.numpy as jnp
from jax.experimental import pallas as pl
from jax.experimental.pallas import tpu as pltpu


def _round_up(x: int, m: int) -> int:
    return (x + m - 1) // m * m


def _lora_kernel(x_ref, a_ref, b_ref, o_ref):
    # x_ref: (tm, in)   a_ref: (in, r)   b_ref: (r, out_pad)   o_ref: (tm, out_pad)
    # Fused (x @ A^T) @ (B^T * scaling); both matmuls on the MXU, f32 accumulation.
    # Scaling is pre-folded into b_ref by the wrapper.
    h = jnp.dot(x_ref[...], a_ref[...], preferred_element_type=jnp.float32)
    y = jnp.dot(h.astype(x_ref.dtype), b_ref[...],
                preferred_element_type=jnp.float32)
    o_ref[...] = y.astype(o_ref.dtype)


def lora_expert_forward(x, lora_A_weight, lora_B_weight, scaling, *,
                        tm=None, vmem_tile_budget_bytes=48 * 1024 * 1024):
    """LoRA expert forward.

    x:              [B, S, in_features]  (feature-last)
    lora_A_weight:  [r, in_features]     (PyTorch nn.Linear layout)
    lora_B_weight:  [out_features, r]
    Returns [B, S, out_features] in x.dtype.
    """
    B, S, in_features = x.shape
    r, in_a = lora_A_weight.shape
    out_features, r_b = lora_B_weight.shape
    assert in_a == in_features and r_b == r

    M = B * S
    io_bytes = jnp.dtype(x.dtype).itemsize
    w_bytes = jnp.dtype(lora_A_weight.dtype).itemsize

    # Lane-dense output: never present a sub-128 last dim to the out_spec.
    out_pad = _round_up(out_features, 128)

    # Row tile: big (mem-bound), 128-aligned, shrunk so the double-buffered
    # x/out tiles fit the VMEM budget (v7x: 64 MiB physical).
    if tm is None:
        tm = 512 if io_bytes >= 4 else 1024
    tm_eff = max(128, _round_up(min(tm, M), 128))
    while (tm_eff > 128 and
           2 * tm_eff * (in_features + out_pad) * io_bytes > vmem_tile_budget_bytes):
        tm_eff -= 128

    M_pad = _round_up(M, tm_eff)

    # TODO(synk): lora_dropout is identity here (inference / p=0); training-mode
    # dropout would need pltpu.prng_seed + pltpu.stateful_bernoulli in-kernel.
    x2d = x.reshape(M, in_features)
    if M_pad != M:
        x2d = jnp.pad(x2d, ((0, M_pad - M), (0, 0)))

    a_t = lora_A_weight.T            # (in_features, r)
    b_t = lora_B_weight.T * scaling  # (r, out_features): fold scaling once
    if out_pad != out_features:
        b_t = jnp.pad(b_t, ((0, 0), (0, out_pad - out_features)))

    # VMEM: double-buffered x/out tiles + (conservatively 2x) resident weights.
    vmem_bytes = (2 * tm_eff * (in_features + out_pad) * io_bytes
                  + 2 * (in_features * r + r * out_pad) * w_bytes)
    vmem_limit = int(min(max(vmem_bytes + (8 << 20), 32 << 20), 100 << 20))

    grid = (M_pad // tm_eff,)

    out2d = pl.pallas_call(
        _lora_kernel,
        out_shape=jax.ShapeDtypeStruct((M_pad, out_pad), x.dtype),
        grid_spec=pltpu.PrefetchScalarGridSpec(
            num_scalar_prefetch=0,
            grid=grid,
            in_specs=[
                pl.BlockSpec((tm_eff, in_features), lambda i: (i, 0)),
                pl.BlockSpec((in_features, r), lambda i: (0, 0)),
                pl.BlockSpec((r, out_pad), lambda i: (0, 0)),
            ],
            out_specs=pl.BlockSpec((tm_eff, out_pad), lambda i: (i, 0)),
        ),
        compiler_params=pltpu.CompilerParams(
            # Row tiles are independent: shards across v7x's 2 TensorCores,
            # no-op on v5e/v6e.
            dimension_semantics=("parallel",),
            vmem_limit_bytes=vmem_limit,
        ),
    )(x2d, a_t, b_t)

    if M_pad != M or out_pad != out_features:
        out2d = out2d[:M, :out_features]
    return out2d.reshape(B, S, out_features)


if __name__ == "__main__":
    # Small shapes consistent with a LoRA adapter on a transformer linear layer.
    batch, seq, hidden = 2, 8, 32
    rank, out_features = 8, 32
    scaling = 0.5  # lora_alpha / r

    key = jax.random.PRNGKey(0)
    kx, ka, kb = jax.random.split(key, 3)
    x = jax.random.normal(kx, (batch, seq, hidden), dtype=jnp.float32)
    lora_A_weight = jax.random.normal(ka, (rank, hidden), dtype=jnp.float32) * 0.1
    lora_B_weight = jax.random.normal(kb, (out_features, rank), dtype=jnp.float32) * 0.1

    # f32 path: exact reference check (dropout = identity).
    out = lora_expert_forward(x, lora_A_weight, lora_B_weight, scaling)
    out = jax.block_until_ready(out)
    ref = (x.reshape(-1, hidden) @ lora_A_weight.T @ lora_B_weight.T * scaling
           ).reshape(batch, seq, out_features)
    assert out.shape == (batch, seq, out_features)
    assert out.dtype == x.dtype
    assert jnp.allclose(out, ref, atol=1e-5, rtol=1e-5)

    # bf16 I/O path: halves HBM traffic (kernel still accumulates in f32).
    out_bf16 = lora_expert_forward(
        x.astype(jnp.bfloat16),
        lora_A_weight.astype(jnp.bfloat16),
        lora_B_weight.astype(jnp.bfloat16),
        scaling,
    )
    out_bf16 = jax.block_until_ready(out_bf16)
    assert out_bf16.shape == (batch, seq, out_features)
    assert out_bf16.dtype == jnp.bfloat16
    assert jnp.allclose(out_bf16.astype(jnp.float32), ref, atol=3e-2, rtol=5e-2)

    print("KERNEL_OK")
</pallas_src>

<mosaic_0001>
module attributes {stable_mosaic.version = 11 : i64} {
  func.func @_lora_kernel(%arg0: i32, %arg1: memref<128x32xf32, #tpu.memory_space<vmem>>, %arg2: memref<32x8xf32, #tpu.memory_space<vmem>>, %arg3: memref<8x128xf32, #tpu.memory_space<vmem>>, %arg4: memref<128x128xf32, #tpu.memory_space<vmem>>) attributes {dimension_semantics = [#tpu.dimension_semantics<parallel>], iteration_bounds = array<i64: 1>, scalar_prefetch = 0 : i64, scratch_operands = 0 : i64, tpu.core_type = #tpu.core_type<tc>, window_params = [{transform_indices = @transform_0, window_bounds = array<i64: 128, 32>}, {pipeline_mode = #tpu.pipeline_mode<synchronous>, transform_indices = @transform_1, window_bounds = array<i64: 32, 8>}, {pipeline_mode = #tpu.pipeline_mode<synchronous>, transform_indices = @transform_2, window_bounds = array<i64: 8, 128>}, {transform_indices = @transform_3, window_bounds = array<i64: 128, 128>}]} {
    %c0 = arith.constant 0 : index
    %c0_0 = arith.constant 0 : index
    %0 = vector.load %arg1[%c0, %c0_0] : memref<128x32xf32, #tpu.memory_space<vmem>>, vector<128x32xf32>
    %c0_1 = arith.constant 0 : index
    %c0_2 = arith.constant 0 : index
    %1 = vector.load %arg2[%c0_1, %c0_2] : memref<32x8xf32, #tpu.memory_space<vmem>>, vector<32x8xf32>
    %cst = arith.constant dense<0.000000e+00> : vector<128x8xf32>
    %2 = tpu.matmul %0, %1, %cst {dimension_numbers = #tpu.dot_dimension_numbers<[1], [0], [0], [1], [0, 0, 1, 1], [], []>} : vector<128x32xf32>, vector<32x8xf32>, vector<128x8xf32> -> vector<128x8xf32>
    %c0_3 = arith.constant 0 : index
    %c0_4 = arith.constant 0 : index
    %3 = vector.load %arg3[%c0_3, %c0_4] : memref<8x128xf32, #tpu.memory_space<vmem>>, vector<8x128xf32>
    %cst_5 = arith.constant dense<0.000000e+00> : vector<128x128xf32>
    %4 = tpu.matmul %2, %3, %cst_5 {dimension_numbers = #tpu.dot_dimension_numbers<[1], [0], [0], [1], [0, 0, 1, 1], [], []>} : vector<128x8xf32>, vector<8x128xf32>, vector<128x128xf32> -> vector<128x128xf32>
    %c0_6 = arith.constant 0 : index
    %c0_7 = arith.constant 0 : index
    %5 = vector.load %arg4[%c0_6, %c0_7] : memref<128x128xf32, #tpu.memory_space<vmem>>, vector<128x128xf32>
    tpu.vector_store %arg4[%c0_6, %c0_7], %4 {strides = array<i32>} : memref<128x128xf32, #tpu.memory_space<vmem>>, vector<128x128xf32>,
    return
  }
  func.func @transform_0(%arg0: i32) -> (i32, i32) {
    %c0_i32 = arith.constant 0 : i32
    %c0_i32_0 = arith.constant 0 : i32
    return %arg0, %c0_i32 : i32, i32
  }
  func.func @transform_1(%arg0: i32) -> (i32, i32) {
    %c0_i32 = arith.constant 0 : i32
    %c0_i32_0 = arith.constant 0 : i32
    %c0_i32_1 = arith.constant 0 : i32
    return %c0_i32, %c0_i32_0 : i32, i32
  }
  func.func @transform_2(%arg0: i32) -> (i32, i32) {
    %c0_i32 = arith.constant 0 : i32
    %c0_i32_0 = arith.constant 0 : i32
    %c0_i32_1 = arith.constant 0 : i32
    return %c0_i32, %c0_i32_0 : i32, i32
  }
  func.func @transform_3(%arg0: i32) -> (i32, i32) {
    %c0_i32 = arith.constant 0 : i32
    %c0_i32_0 = arith.constant 0 : i32
    return %arg0, %c0_i32 : i32, i32
  }
}

</mosaic_0001>

<llo_original>
// kernel: tpu_custom_call.1
$region0: #{tpu_custom_call.1}
  #allocation0 [shape = 'u32[]', space=smem, size = 0x4, offset = 0x4, fixed_abs, tag = 'smem constant byte address 0x4 - core index']
  #allocation1 [shape = 'u32[144,128]{1,0:T(1,128)}', space=vmem, size = 0x12000, scoped, tag = 'internal scratch']
  %s0 = inlined_call_operand.vmem [shape: f32[128,32], index: 0, kind: input, shape index: {}]
  %s1 = inlined_call_operand.vmem [shape: f32[32,8], index: 1, kind: input, shape index: {}]
  %s2 = inlined_call_operand.vmem [shape: f32[8,128], index: 2, kind: input, shape index: {}]
  %s3 = inlined_call_operand.hbm [shape: f32[128,128], index: 3, kind: output, shape index: {}]
  %s4 = sld [smem:[#allocation0]]
  $region22: #{tpu_custom_call.1} parent=0
    _
  %s6 = ssub.s32 1, %s4
  %s7 = scalar_select 0, %s6, %s4
  $region1: #{tpu_custom_call.1} parent=0
    #allocation2 [shape = 'u8[65536]{0}', space=vmem, size = 0x10000, scoped, tag = 'output window, operand 0, single buffered']
    #allocation3 [shape = 's32[1]{0}', space=sflag, size = 0x4, scoped, tag = 'scoped memory for tpu_custom_call.1']
    %8 = vsyncpa [#allocation3], 0
    // Predicated region
    $region2: #{tpu_custom_call.1} parent=1 // pred_check
      _
    $region3: #{tpu_custom_call.1} parent=1 // pred_check_branch
      %10 = sbr.rel (0) target = $region5
    $region4: #{tpu_custom_call.1} parent=1 // pred_region
      _
    $region5: #{tpu_custom_call.1} parent=1 // pred_fallthru
      _
    // Predicated region
    $region6: #{tpu_custom_call.1} parent=1 // pred_check
      _
    $region7: #{tpu_custom_call.1} parent=1 // pred_check_branch
      %12 = sbr.rel (0) target = $region9
    $region8: #{tpu_custom_call.1} parent=1 // pred_region
      _
    $region9: #{tpu_custom_call.1} parent=1 // pred_fallthru
      _
    // Predicated region
    $region10: #{tpu_custom_call.1} parent=1 // pred_check
      _
    $region11: #{tpu_custom_call.1} parent=1 // pred_check_branch
      %14 = sbr.rel (0) target = $region13
    $region12: #{tpu_custom_call.1} parent=1 // pred_region
      _
    $region13: #{tpu_custom_call.1} parent=1 // pred_fallthru
      _
    %v15 = vld [vmem:[%s0] sm:$0xff]
    %v16 = vld [vmem:[%s0 + $0x8] sm:$0xff]
    %v17 = vld [vmem:[%s0 + $0x10] sm:$0xff]
    %v18 = vld [vmem:[%s0 + $0x18] sm:$0xff]
    %v19 = vld [vmem:[%s0 + $0x20] sm:$0xff]
    %v20 = vld [vmem:[%s0 + $0x28] sm:$0xff]
    %v21 = vld [vmem:[%s0 + $0x30] sm:$0xff]
    %v22 = vld [vmem:[%s0 + $0x38] sm:$0xff]
    %v23 = vld [vmem:[%s0 + $0x40] sm:$0xff]
    %v24 = vld [vmem:[%s0 + $0x48] sm:$0xff]
    %v25 = vld [vmem:[%s0 + $0x50] sm:$0xff]
    %v26 = vld [vmem:[%s0 + $0x58] sm:$0xff]
    %v27 = vld [vmem:[%s0 + $0x60] sm:$0xff]
    %v28 = vld [vmem:[%s0 + $0x68] sm:$0xff]
    %v29 = vld [vmem:[%s0 + $0x70] sm:$0xff]
    %v30 = vld [vmem:[%s0 + $0x78] sm:$0xff]
    %v31 = vld [vmem:[%s1] sm:$0xff]
    %v32 = vld [vmem:[%s1 + $0x8] sm:$0xff]
    %v33 = vld [vmem:[%s1 + $0x10] sm:$0xff]
    %v34 = vld [vmem:[%s1 + $0x18] sm:$0xff]
    %vm35 = vcmask 261120
    %v37 = vsel %vm35, %v15, 0
    %v40 = vsel %vm35, %v16, 0
    %v43 = vsel %vm35, %v17, 0
    %v46 = vsel %vm35, %v18, 0
    %v49 = vsel %vm35, %v19, 0
    %v52 = vsel %vm35, %v20, 0
    %v55 = vsel %vm35, %v21, 0
    %v58 = vsel %vm35, %v22, 0
    %v61 = vsel %vm35, %v23, 0
    %v64 = vsel %vm35, %v24, 0
    %v67 = vsel %vm35, %v25, 0
    %v70 = vsel %vm35, %v26, 0
    %v73 = vsel %vm35, %v27, 0
    %v76 = vsel %vm35, %v28, 0
    %v79 = vsel %vm35, %v29, 0
    %v82 = vsel %vm35, %v30, 0
    %84 = vmatprep.subr.mxu0 0.0
    %85 = vmatpush1.msra.mxu0 %v31
    %86 = vmatprep.subr.mxu0 0.0
    %87 = vmatpush1.msra.mxu0 %v32
    %88 = vmatprep.subr.mxu0 0.0
    %89 = vmatpush1.msra.mxu0 %v33
    %90 = vmatprep.subr.mxu0 0.0
    %91 = vmatpush1.msra.mxu0 %v34
    %92 = vmatprep.subr.mxu0 0.0
    %93 = vmatpush1.msra.mxu0 0.0
    %94 = vmatprep.subr.mxu0 0.0
    %95 = vmatpush1.msra.mxu0 0.0
    %96 = vmatprep.subr.mxu0 0.0
    %97 = vmatpush1.msra.mxu0 0.0
    %98 = vmatprep.subr.mxu0 0.0
    %99 = vmatpush1.msra.mxu0 0.0
    %100 = vmatprep.subr.mxu0 0.0
    %101 = vmatpush1.msra.mxu0 0.0
    %102 = vmatprep.subr.mxu0 0.0
    %103 = vmatpush1.msra.mxu0 0.0
    %104 = vmatprep.subr.mxu0 0.0
    %105 = vmatpush1.msra.mxu0 0.0
    %106 = vmatprep.subr.mxu0 0.0
    %107 = vmatpush1.msra.mxu0 0.0
    %108 = vmatprep.subr.mxu0 0.0
    %109 = vmatpush1.msra.mxu0 0.0
    %110 = vmatprep.subr.mxu0 0.0
    %111 = vmatpush1.msra.mxu0 0.0
    %112 = vmatprep.subr.mxu0 0.0
    %113 = vmatpush1.msra.mxu0 0.0
    %114 = vmatprep.subr.mxu0 0.0
    %115 = vmatpush1.msra.mxu0 0.0
    %116 = vmatprep.subr.mxu0 0.0
    %117 = vmatpush1.msra.mxu0 0.0
    %118 = vmatprep.subr.mxu0 0.0
    %119 = vmatpush1.msra.mxu0 0.0
    %120 = vmatprep.subr.mxu0 0.0
    %121 = vmatpush1.msra.mxu0 0.0
    %122 = vmatprep.subr.mxu0 0.0
    %123 = vmatpush1.msra.mxu0 0.0
    %124 = vmatprep.subr.mxu0 0.0
    %125 = vmatpush1.msra.mxu0 0.0
    %126 = vmatprep.subr.mxu0 0.0
    %127 = vmatpush1.msra.mxu0 0.0
    %128 = vmatprep.subr.mxu0 0.0
    %129 = vmatpush1.msra.mxu0 0.0
    %130 = vmatprep.subr.mxu0 0.0
    %131 = vmatpush1.msra.mxu0 0.0
    %132 = vmatprep.subr.mxu0 0.0
    %133 = vmatpush1.msra.mxu0 0.0
    %134 = vmatprep.subr.mxu0 0.0
    %135 = vmatpush1.msra.mxu0 0.0
    %136 = vmatprep.subr.mxu0 0.0
    %137 = vmatpush1.msra.mxu0 0.0
    %138 = vmatprep.subr.mxu0 0.0
    %139 = vmatpush1.msra.mxu0 0.0
    %140 = vmatprep.subr.mxu0 0.0
    %141 = vmatpush1.msra.mxu0 0.0
    %142 = vmatprep.subr.mxu0 0.0
    %143 = vmatpush1.msra.mxu0 0.0
    %144 = vmatprep.subr.mxu0 0.0
    %145 = vmatpush1.msra.mxu0 0.0
    %146 = vmatprep.subr.mxu0 0.0
    %147 = vmatpush1.msra.mxu0 0.0
    %148 = vmatprep.mubr.f32.mxu0 0.0
    %149 = vmatmul.mubr.f32.gmra.mrb[0].mxu0 %v37
    %v150 = vpop.f32.mrb[0].mxu0
    %v151 = vadd.f32 0.0, %v150
    %v152 = vpop.f32.mrb[0].mxu0
    %153 = vmatprep.mubr.f32.mxu0 0.0
    %154 = vmatmul.mubr.f32.gmra.mrb[0].mxu0 %v40
    %v155 = vpop.f32.mrb[0].mxu0
    %v156 = vadd.f32 0.0, %v155
    %v157 = vpop.f32.mrb[0].mxu0
    %158 = vmatprep.mubr.f32.mxu0 0.0
    %159 = vmatmul.mubr.f32.gmra.mrb[0].mxu0 %v43
    %v160 = vpop.f32.mrb[0].mxu0
    %v161 = vadd.f32 0.0, %v160
    %v162 = vpop.f32.mrb[0].mxu0
    %163 = vmatprep.mubr.f32.mxu0 0.0
    %164 = vmatmul.mubr.f32.gmra.mrb[0].mxu0 %v46
    %v165 = vpop.f32.mrb[0].mxu0
    %v166 = vadd.f32 0.0, %v165
    %v167 = vpop.f32.mrb[0].mxu0
    %168 = vmatprep.mubr.f32.mxu0 0.0
    %169 = vmatmul.mubr.f32.gmra.mrb[0].mxu0 %v49
    %v170 = vpop.f32.mrb[0].mxu0
    %v171 = vadd.f32 0.0, %v170
    %v172 = vpop.f32.mrb[0].mxu0
    %173 = vmatprep.mubr.f32.mxu0 0.0
    %174 = vmatmul.mubr.f32.gmra.mrb[0].mxu0 %v52
    %v175 = vpop.f32.mrb[0].mxu0
    %v176 = vadd.f32 0.0, %v175
    %v177 = vpop.f32.mrb[0].mxu0
    %178 = vmatprep.mubr.f32.mxu0 0.0
    %179 = vmatmul.mubr.f32.gmra.mrb[0].mxu0 %v55
    %v180 = vpop.f32.mrb[0].mxu0
    %v181 = vadd.f32 0.0, %v180
    %v182 = vpop.f32.mrb[0].mxu0
    %183 = vmatprep.mubr.f32.mxu0 0.0
    %184 = vmatmul.mubr.f32.gmra.mrb[0].mxu0 %v58
    %v185 = vpop.f32.mrb[0].mxu0
    %v186 = vadd.f32 0.0, %v185
    %v187 = vpop.f32.mrb[0].mxu0
    %188 = vmatprep.mubr.f32.mxu0 0.0
    %189 = vmatmul.mubr.f32.gmra.mrb[0].mxu0 %v61
    %v190 = vpop.f32.mrb[0].mxu0
    %v191 = vadd.f32 0.0, %v190
    %v192 = vpop.f32.mrb[0].mxu0
    %193 = vmatprep.mubr.f32.mxu0 0.0
    %194 = vmatmul.mubr.f32.gmra.mrb[0].mxu0 %v64
    %v195 = vpop.f32.mrb[0].mxu0
    %v196 = vadd.f32 0.0, %v195
    %v197 = vpop.f32.mrb[0].mxu0
    %198 = vmatprep.mubr.f32.mxu0 0.0
    %199 = vmatmul.mubr.f32.gmra.mrb[0].mxu0 %v67
    %v200 = vpop.f32.mrb[0].mxu0
    %v201 = vadd.f32 0.0, %v200
    %v202 = vpop.f32.mrb[0].mxu0
    %203 = vmatprep.mubr.f32.mxu0 0.0
    %204 = vmatmul.mubr.f32.gmra.mrb[0].mxu0 %v70
    %v205 = vpop.f32.mrb[0].mxu0
    %v206 = vadd.f32 0.0, %v205
    %v207 = vpop.f32.mrb[0].mxu0
    %208 = vmatprep.mubr.f32.mxu0 0.0
    %209 = vmatmul.mubr.f32.gmra.mrb[0].mxu0 %v73
    %v210 = vpop.f32.mrb[0].mxu0
    %v211 = vadd.f32 0.0, %v210
    %v212 = vpop.f32.mrb[0].mxu0
    %213 = vmatprep.mubr.f32.mxu0 0.0
    %214 = vmatmul.mubr.f32.gmra.mrb[0].mxu0 %v76
    %v215 = vpop.f32.mrb[0].mxu0
    %v216 = vadd.f32 0.0, %v215
    %v217 = vpop.f32.mrb[0].mxu0
    %218 = vmatprep.mubr.f32.mxu0 0.0
    %219 = vmatmul.mubr.f32.gmra.mrb[0].mxu0 %v79
    %v220 = vpop.f32.mrb[0].mxu0
    %v221 = vadd.f32 0.0, %v220
    %v222 = vpop.f32.mrb[0].mxu0
    %223 = vmatprep.mubr.f32.mxu0 0.0
    %224 = vmatmul.mubr.f32.gmra.mrb[0].mxu0 %v82
    %v225 = vpop.f32.mrb[0].mxu0
    %v226 = vadd.f32 0.0, %v225
    %v227 = vpop.f32.mrb[0].mxu0
    %228 = vdwg.mxu0
    %v229 = vld [vmem:[%s2] sm:$0xff]
    %vm230 = vcmask 64512
    %v232 = vsel %vm230, %v151, 0
    %v235 = vsel %vm230, %v156, 0
    %v238 = vsel %vm230, %v161, 0
    %v241 = vsel %vm230, %v166, 0
    %v244 = vsel %vm230, %v171, 0
    %v247 = vsel %vm230, %v176, 0
    %v250 = vsel %vm230, %v181, 0
    %v253 = vsel %vm230, %v186, 0
    %v256 = vsel %vm230, %v191, 0
    %v259 = vsel %vm230, %v196, 0
    %v262 = vsel %vm230, %v201, 0
    %v265 = vsel %vm230, %v206, 0
    %v268 = vsel %vm230, %v211, 0
    %v271 = vsel %vm230, %v216, 0
    %v274 = vsel %vm230, %v221, 0
    %v277 = vsel %vm230, %v226, 0
    %279 = vmatprep.subr.mxu0 0.0
    %280 = vmatpush1.msra.mxu0 %v229
    %281 = vmatprep.subr.mxu0 0.0
    %282 = vmatpush1.msra.mxu0 0.0
    %283 = vmatprep.subr.mxu0 0.0
    %284 = vmatpush1.msra.mxu0 0.0
    %285 = vmatprep.subr.mxu0 0.0
    %286 = vmatpush1.msra.mxu0 0.0
    %287 = vmatprep.subr.mxu0 0.0
    %288 = vmatpush1.msra.mxu0 0.0
    %289 = vmatprep.subr.mxu0 0.0
    %290 = vmatpush1.msra.mxu0 0.0
    %291 = vmatprep.subr.mxu0 0.0
    %292 = vmatpush1.msra.mxu0 0.0
    %293 = vmatprep.subr.mxu0 0.0
    %294 = vmatpush1.msra.mxu0 0.0
    %295 = vmatprep.subr.mxu0 0.0
    %296 = vmatpush1.msra.mxu0 0.0
    %297 = vmatprep.subr.mxu0 0.0
    %298 = vmatpush1.msra.mxu0 0.0
    %299 = vmatprep.subr.mxu0 0.0
    %300 = vmatpush1.msra.mxu0 0.0
    %301 = vmatprep.subr.mxu0 0.0
    %302 = vmatpush1.msra.mxu0 0.0
    %303 = vmatprep.subr.mxu0 0.0
    %304 = vmatpush1.msra.mxu0 0.0
    %305 = vmatprep.subr.mxu0 0.0
    %306 = vmatpush1.msra.mxu0 0.0
    %307 = vmatprep.subr.mxu0 0.0
    %308 = vmatpush1.msra.mxu0 0.0
    %309 = vmatprep.subr.mxu0 0.0
    %310 = vmatpush1.msra.mxu0 0.0
    %311 = vmatprep.subr.mxu0 0.0
    %312 = vmatpush1.msra.mxu0 0.0
    %313 = vmatprep.subr.mxu0 0.0
    %314 = vmatpush1.msra.mxu0 0.0
    %315 = vmatprep.subr.mxu0 0.0
    %316 = vmatpush1.msra.mxu0 0.0
    %317 = vmatprep.subr.mxu0 0.0
    %318 = vmatpush1.msra.mxu0 0.0
    %319 = vmatprep.subr.mxu0 0.0
    %320 = vmatpush1.msra.mxu0 0.0
    %321 = vmatprep.subr.mxu0 0.0
    %322 = vmatpush1.msra.mxu0 0.0
    %323 = vmatprep.subr.mxu0 0.0
    %324 = vmatpush1.msra.mxu0 0.0
    %325 = vmatprep.subr.mxu0 0.0
    %326 = vmatpush1.msra.mxu0 0.0
    %327 = vmatprep.subr.mxu0 0.0
    %328 = vmatpush1.msra.mxu0 0.0
    %329 = vmatprep.subr.mxu0 0.0
    %330 = vmatpush1.msra.mxu0 0.0
    %331 = vmatprep.subr.mxu0 0.0
    %332 = vmatpush1.msra.mxu0 0.0
    %333 = vmatprep.subr.mxu0 0.0
    %334 = vmatpush1.msra.mxu0 0.0
    %335 = vmatprep.subr.mxu0 0.0
    %336 = vmatpush1.msra.mxu0 0.0
    %337 = vmatprep.subr.mxu0 0.0
    %338 = vmatpush1.msra.mxu0 0.0
    %339 = vmatprep.subr.mxu0 0.0
    %340 = vmatpush1.msra.mxu0 0.0
    %341 = vmatprep.subr.mxu0 0.0
    %342 = vmatpush1.msra.mxu0 0.0
    %343 = vmatprep.mubr.f32.mxu0 0.0
    %344 = vmatmul.mubr.f32.gmra.mrb[0].mxu0 %v232
    %v345 = vpop.f32.mrb[0].mxu0
    %v346 = vadd.f32 0.0, %v345
    %v347 = vpop.f32.mrb[0].mxu0
    %348 = vmatprep.mubr.f32.mxu0 0.0
    %349 = vmatmul.mubr.f32.gmra.mrb[0].mxu0 %v235
    %v350 = vpop.f32.mrb[0].mxu0
    %v351 = vadd.f32 0.0, %v350
    %v352 = vpop.f32.mrb[0].mxu0
    %353 = vmatprep.mubr.f32.mxu0 0.0
    %354 = vmatmul.mubr.f32.gmra.mrb[0].mxu0 %v238
    %v355 = vpop.f32.mrb[0].mxu0
    %v356 = vadd.f32 0.0, %v355
    %v357 = vpop.f32.mrb[0].mxu0
    %358 = vmatprep.mubr.f32.mxu0 0.0
    %359 = vmatmul.mubr.f32.gmra.mrb[0].mxu0 %v241
    %v360 = vpop.f32.mrb[0].mxu0
    %v361 = vadd.f32 0.0, %v360
    %v362 = vpop.f32.mrb[0].mxu0
    %363 = vmatprep.mubr.f32.mxu0 0.0
    %364 = vmatmul.mubr.f32.gmra.mrb[0].mxu0 %v244
    %v365 = vpop.f32.mrb[0].mxu0
    %v366 = vadd.f32 0.0, %v365
    %v367 = vpop.f32.mrb[0].mxu0
    %368 = vmatprep.mubr.f32.mxu0 0.0
    %369 = vmatmul.mubr.f32.gmra.mrb[0].mxu0 %v247
    %v370 = vpop.f32.mrb[0].mxu0
    %v371 = vadd.f32 0.0, %v370
    %v372 = vpop.f32.mrb[0].mxu0
    %373 = vmatprep.mubr.f32.mxu0 0.0
    %374 = vmatmul.mubr.f32.gmra.mrb[0].mxu0 %v250
    %v375 = vpop.f32.mrb[0].mxu0
    %v376 = vadd.f32 0.0, %v375
    %v377 = vpop.f32.mrb[0].mxu0
    %378 = vmatprep.mubr.f32.mxu0 0.0
    %379 = vmatmul.mubr.f32.gmra.mrb[0].mxu0 %v253
    %v380 = vpop.f32.mrb[0].mxu0
    %v381 = vadd.f32 0.0, %v380
    %v382 = vpop.f32.mrb[0].mxu0
    %383 = vmatprep.mubr.f32.mxu0 0.0
    %384 = vmatmul.mubr.f32.gmra.mrb[0].mxu0 %v256
    %v385 = vpop.f32.mrb[0].mxu0
    %v386 = vadd.f32 0.0, %v385
    %v387 = vpop.f32.mrb[0].mxu0
    %388 = vmatprep.mubr.f32.mxu0 0.0
    %389 = vmatmul.mubr.f32.gmra.mrb[0].mxu0 %v259
    %v390 = vpop.f32.mrb[0].mxu0
    %v391 = vadd.f32 0.0, %v390
    %v392 = vpop.f32.mrb[0].mxu0
    %393 = vmatprep.mubr.f32.mxu0 0.0
    %394 = vmatmul.mubr.f32.gmra.mrb[0].mxu0 %v262
    %v395 = vpop.f32.mrb[0].mxu0
    %v396 = vadd.f32 0.0, %v395
    %v397 = vpop.f32.mrb[0].mxu0
    %398 = vmatprep.mubr.f32.mxu0 0.0
    %399 = vmatmul.mubr.f32.gmra.mrb[0].mxu0 %v265
    %v400 = vpop.f32.mrb[0].mxu0
    %v401 = vadd.f32 0.0, %v400
    %v402 = vpop.f32.mrb[0].mxu0
    %403 = vmatprep.mubr.f32.mxu0 0.0
    %404 = vmatmul.mubr.f32.gmra.mrb[0].mxu0 %v268
    %v405 = vpop.f32.mrb[0].mxu0
    %v406 = vadd.f32 0.0, %v405
    %v407 = vpop.f32.mrb[0].mxu0
    %408 = vmatprep.mubr.f32.mxu0 0.0
    %409 = vmatmul.mubr.f32.gmra.mrb[0].mxu0 %v271
    %v410 = vpop.f32.mrb[0].mxu0
    %v411 = vadd.f32 0.0, %v410
    %v412 = vpop.f32.mrb[0].mxu0
    %413 = vmatprep.mubr.f32.mxu0 0.0
    %414 = vmatmul.mubr.f32.gmra.mrb[0].mxu0 %v274
    %v415 = vpop.f32.mrb[0].mxu0
    %v416 = vadd.f32 0.0, %v415
    %v417 = vpop.f32.mrb[0].mxu0
    %418 = vmatprep.mubr.f32.mxu0 0.0
    %419 = vmatmul.mubr.f32.gmra.mrb[0].mxu0 %v277
    %v420 = vpop.f32.mrb[0].mxu0
    %v421 = vadd.f32 0.0, %v420
    %v422 = vpop.f32.mrb[0].mxu0
    %423 = vdwg.mxu0
    %424 = vst [vmem:[#allocation2] sm:$0xff] %v346
    %425 = vst [vmem:[#allocation2 + $0x8] sm:$0xff] %v351
    %426 = vst [vmem:[#allocation2 + $0x10] sm:$0xff] %v356
    %427 = vst [vmem:[#allocation2 + $0x18] sm:$0xff] %v361
    %428 = vst [vmem:[#allocation2 + $0x20] sm:$0xff] %v366
    %429 = vst [vmem:[#allocation2 + $0x28] sm:$0xff] %v371
    %430 = vst [vmem:[#allocation2 + $0x30] sm:$0xff] %v376
    %431 = vst [vmem:[#allocation2 + $0x38] sm:$0xff] %v381
    %432 = vst [vmem:[#allocation2 + $0x40] sm:$0xff] %v386
    %433 = vst [vmem:[#allocation2 + $0x48] sm:$0xff] %v391
    %434 = vst [vmem:[#allocation2 + $0x50] sm:$0xff] %v396
    %435 = vst [vmem:[#allocation2 + $0x58] sm:$0xff] %v401
    %436 = vst [vmem:[#allocation2 + $0x60] sm:$0xff] %v406
    %437 = vst [vmem:[#allocation2 + $0x68] sm:$0xff] %v411
    %438 = vst [vmem:[#allocation2 + $0x70] sm:$0xff] %v416
    %439 = vst [vmem:[#allocation2 + $0x78] sm:$0xff] %v421
    // Predicated region
    $region14: #{tpu_custom_call.1} parent=1 // pred_check
      _
    $region15: #{tpu_custom_call.1} parent=1 // pred_check_branch
      %441 = sbr.rel (0) target = $region17
    $region16: #{tpu_custom_call.1} parent=1 // pred_region
      %s443 = ssub.s32 2048, 2048
      %444 = vsyncadd [#allocation3], %s443
      %s445 = sshll.u32 [#allocation2], 4
      %s446 = int_to_ptr.vmem [resolvable:$true] %s445
      %451 = dma.vmem_to_hbm [thread:$0]  %s446, 2048, %s3, [#allocation3], 128, 128, 8
    $region17: #{tpu_custom_call.1} parent=1 // pred_fallthru
      _
    // Predicated region
    $region18: #{tpu_custom_call.1} parent=1 // pred_check
      _
    $region19: #{tpu_custom_call.1} parent=1 // pred_check_branch
      %453 = sbr.rel (0) target = $region21
    $region20: #{tpu_custom_call.1} parent=1 // pred_region
      %454 = dma.done [#allocation3], 2048
    $region21: #{tpu_custom_call.1} parent=1 // pred_fallthru
      _
    %455 = vsyncpa [#allocation3], 1

</llo_original>
